<compile_context>
chip_gen: v6e
topology: v6e:2x2x1
jax: 0.10.0
libtpu: 0.0.40
codegen_flags: <defaults>
</compile_context>

<pallas_src>
import functools
import math

import jax
import jax.numpy as jnp
from jax.experimental import pallas as pl
from jax.experimental.pallas import tpu as pltpu

GAMMA = 0.2
THRESH_DECAY = 0.7

ROW_ALIGN = 16      # sublane multiple valid for f32 (8,128) and bf16 (16,128) tiles
LANE_CAP = 1024     # max lane (last-dim) width, multiple of 128 (lane-dense stores)
T_BLK_MAX = 16      # max timesteps fused (unrolled) per grid step


def _round_up(x, m):
    return (x + m - 1) // m * m


@functools.lru_cache(maxsize=None)
def _vmem_budget():
    """(vmem_limit_bytes, target_tile_bytes) tuned per TPU generation."""
    cap = 64 * 1024 * 1024
    try:
        cap = int(getattr(pltpu.get_tpu_info(), "vmem_capacity_bytes", cap))
    except Exception:
        pass
    if cap >= 100 * 1024 * 1024:                  # v5e / v6e: 128 MiB physical VMEM
        return 96 * 1024 * 1024, 6 * 1024 * 1024
    return 48 * 1024 * 1024, 4 * 1024 * 1024      # v7x: 64 MiB physical VMEM


def _choose_layout(n_elems, dv_bytes, target_tile_bytes):
    """Lane-dense padded (rows, cols) layout and row-block size (all padding, no divisor trap)."""
    cols = 128
    while cols * 2 <= LANE_CAP and n_elems >= cols * 2 * ROW_ALIGN:
        cols *= 2
    rows = _round_up(pl.cdiv(n_elems, cols), ROW_ALIGN)

    # Row block: ~target_tile_bytes of f32 state per block, multiple of ROW_ALIGN.
    max_block_rows = max(ROW_ALIGN,
                         (target_tile_bytes // (cols * 4)) // ROW_ALIGN * ROW_ALIGN)
    block_rows = min(rows, max_block_rows)
    # Give the "parallel" row axis >=2 blocks when possible (feeds both v7x TensorCores).
    if rows >= 2 * ROW_ALIGN and rows // block_rows < 2:
        block_rows = max(ROW_ALIGN, (rows // 2) // ROW_ALIGN * ROW_ALIGN)
    rows = _round_up(rows, block_rows)
    return rows, cols, block_rows


def _choose_t_blk(T, block_rows, cols, dv_bytes, target_tile_bytes):
    """Fuse several timesteps per grid step so small layers amortize per-step overhead."""
    step_bytes = block_rows * cols * dv_bytes
    t_blk = int(max(1, min(T_BLK_MAX, target_tile_bytes // max(1, step_bytes))))
    t_blk = min(t_blk, T)
    while T % t_blk:
        t_blk -= 1
    return t_blk


def _plif_kernel(dv_ref, v0_hbm, vth0_hbm, tau_ref,
                 spike_ref, v_hbm, vth_hbm,
                 v_sc, vth_sc,
                 *, t_blk, block_rows, v_reset):
    i = pl.program_id(0)
    tb = pl.program_id(1)
    row0 = pl.multiple_of(i * block_rows, block_rows)

    # One-shot state load per row block (state lives in HBM, not double-buffered).
    @pl.when(tb == 0)
    def _load_state():
        pltpu.sync_copy(v0_hbm.at[pl.ds(row0, block_rows), :], v_sc)
        pltpu.sync_copy(vth0_hbm.at[pl.ds(row0, block_rows), :], vth_sc)

    tau = tau_ref[0]                     # scalar tau from SMEM
    v_reset_f = jnp.float32(v_reset)

    # Unrolled fused timesteps; all arithmetic in f32 (v5e VPU has no bf16 ALU).
    for t in range(t_blk):
        dv = dv_ref[t].astype(jnp.float32)
        v_prev = v_sc[...]
        vth_prev = vth_sc[...]
        # exact torch form: v += (dv - (v - v_reset)) / tau
        v = v_prev + (dv - (v_prev - v_reset_f)) / tau
        fired = v > vth_prev
        spike_ref[t] = fired.astype(spike_ref.dtype)
        # soft reset + adaptive threshold as single selects (exact: spike is 0/1)
        v_sc[...] = jnp.where(fired, v_reset_f, v)
        vth_dec = vth_prev * THRESH_DECAY
        vth_sc[...] = jnp.where(fired, GAMMA + vth_dec, vth_dec)

    # One-shot state writeback per row block.
    @pl.when(tb == pl.num_programs(1) - 1)
    def _store_state():
        pltpu.sync_copy(v_sc, v_hbm.at[pl.ds(row0, block_rows), :])
        pltpu.sync_copy(vth_sc, vth_hbm.at[pl.ds(row0, block_rows), :])


@functools.partial(jax.jit,
                   static_argnames=("t_blk", "block_rows", "v_reset", "spike_dtype"),
                   donate_argnums=(1, 2))
def plif_steps(dv_seq, v0, vth0, tau, *, t_blk, block_rows, v_reset, spike_dtype):
    """Fused T-step PLIF forward.  dv_seq: [T, rows, cols]; v0/vth0: [rows, cols] f32."""
    T, rows, cols = dv_seq.shape
    grid = (rows // block_rows, T // t_blk)

    seq_block = (t_blk, block_rows, cols)
    seq_map = lambda i, tb: (tb, i, 0)

    vmem_limit, _ = _vmem_budget()

    dv_bytes = dv_seq.dtype.itemsize
    spk_bytes = jnp.dtype(spike_dtype).itemsize
    n = T * rows * cols
    cost = pl.CostEstimate(
        flops=10 * n,
        transcendentals=0,
        bytes_accessed=n * (dv_bytes + spk_bytes) + 4 * rows * cols * 4)

    kernel = functools.partial(_plif_kernel, t_blk=t_blk, block_rows=block_rows,
                               v_reset=float(v_reset))
    state_sds = jax.ShapeDtypeStruct((rows, cols), jnp.float32)

    return pl.pallas_call(
        kernel,
        out_shape=(jax.ShapeDtypeStruct((T, rows, cols), spike_dtype),
                   state_sds, state_sds),
        grid=grid,
        in_specs=[
            pl.BlockSpec(seq_block, seq_map),                    # dv (pipelined)
            pl.BlockSpec(memory_space=pl.ANY),                   # v0    (HBM, manual DMA)
            pl.BlockSpec(memory_space=pl.ANY),                   # v_th0 (HBM, manual DMA)
            pl.BlockSpec(memory_space=pltpu.MemorySpace.SMEM),   # tau scalar
        ],
        out_specs=(
            pl.BlockSpec(seq_block, seq_map),                    # spikes (pipelined)
            pl.BlockSpec(memory_space=pl.ANY),                   # v_T
            pl.BlockSpec(memory_space=pl.ANY),                   # v_th_T
        ),
        scratch_shapes=[
            pltpu.VMEM((block_rows, cols), jnp.float32),         # v carried across time
            pltpu.VMEM((block_rows, cols), jnp.float32),         # v_th carried across time
        ],
        input_output_aliases={1: 1, 2: 2},                       # in-place state update
        cost_estimate=cost,
        compiler_params=pltpu.CompilerParams(
            dimension_semantics=("parallel", "arbitrary"),
            vmem_limit_bytes=vmem_limit),
    )(dv_seq, v0, vth0, tau)


class PLIF:
    """JAX/Pallas port of spikenet.neuron.PLIF (surrogate='triangle', forward pass only)."""

    def __init__(self, tau=1.0, v_threshold=1.0, v_reset=0.0, alpha=1.0, spike_dtype=None):
        self.tau = jnp.asarray(tau, dtype=jnp.float32)   # learnable parameter in torch
        self.v_threshold = float(v_threshold)
        self.v_reset = float(v_reset)
        self.alpha = jnp.asarray(alpha, dtype=jnp.float32)
        self.spike_dtype = spike_dtype                   # None -> follow dv dtype
        # TODO(synk): triangle surrogate-gradient backward is not implemented; forward only.
        self.reset()

    def reset(self):
        self.v = None        # torch: scalar 0.0 until first forward
        self.v_th = None     # torch: scalar v_threshold until first forward
        self._step_shape = None

    def _ensure_state(self, step_shape, dv_bytes):
        if self.v is None:
            _, target_tile = _vmem_budget()
            n = math.prod(step_shape)
            self._step_shape = step_shape
            self._rows, self._cols, self._block_rows = _choose_layout(n, dv_bytes, target_tile)
            self.v = jnp.zeros((self._rows, self._cols), jnp.float32)
            self.v_th = jnp.full((self._rows, self._cols), self.v_threshold, jnp.float32)
        elif step_shape != self._step_shape:
            raise ValueError(
                f"PLIF state was initialized for per-step shape {self._step_shape}, "
                f"got {step_shape}; call reset() first.")

    def forward(self, dv):
        """Single time step, dv: [B, C, H, W]."""
        return self.forward_sequence(dv[None])[0]

    def forward_sequence(self, dv_seq):
        """Fused multi-step forward, dv_seq: [T, ...]; state stays in VMEM across time."""
        T = dv_seq.shape[0]
        step_shape = dv_seq.shape[1:]
        dv_bytes = dv_seq.dtype.itemsize
        self._ensure_state(step_shape, dv_bytes)
        rows, cols, block_rows = self._rows, self._cols, self._block_rows

        _, target_tile = _vmem_budget()
        t_blk = _choose_t_blk(T, block_rows, cols, dv_bytes, target_tile)

        n = math.prod(step_shape)
        dv_flat = jnp.reshape(dv_seq, (T, n))
        pad = rows * cols - n
        if pad:
            dv_flat = jnp.pad(dv_flat, ((0, 0), (0, pad)))
        dv3 = jnp.reshape(dv_flat, (T, rows, cols))

        spike_dtype = jnp.dtype(self.spike_dtype or dv_seq.dtype)
        tau = jnp.reshape(self.tau, (1,)).astype(jnp.float32)

        spikes3, self.v, self.v_th = plif_steps(
            dv3, self.v, self.v_th, tau,
            t_blk=t_blk, block_rows=block_rows, v_reset=self.v_reset,
            spike_dtype=spike_dtype)

        spikes = jnp.reshape(spikes3, (T, rows * cols))[:, :n]
        return jnp.reshape(spikes, (T,) + step_shape)

    __call__ = forward


def _ref_plif_sequence(dv_seq, tau, v_threshold, v_reset):
    """Pure-JAX reference with the exact torch arithmetic (division, mul/add form)."""
    tau = jnp.float32(tau)
    shape = dv_seq.shape[1:]
    v = jnp.zeros(shape, jnp.float32)
    v_th = jnp.full(shape, v_threshold, jnp.float32)
    out = []
    for dv in dv_seq:
        dv = dv.astype(jnp.float32)
        v = v + (dv - (v - v_reset)) / tau
        spike = (v > v_th).astype(jnp.float32)
        v = (1.0 - spike) * v + spike * v_reset
        v_th = GAMMA * spike + v_th * THRESH_DECAY
        out.append(spike)
    return jnp.stack(out)


if __name__ == "__main__":
    key = jax.random.PRNGKey(0)
    B, C, H, W = 2, 4, 16, 16
    T = 8
    tau, v_th0, v_reset = 2.0, 1.0, 0.0

    dv_seq = jax.random.normal(key, (T, B, C, H, W), dtype=jnp.float32) * 2.0

    # Fused T-step path (f32 I/O, matches the torch module).
    neuron = PLIF(tau=tau, v_threshold=v_th0, v_reset=v_reset)
    spikes_fused = jax.block_until_ready(neuron.forward_sequence(dv_seq))

    # Per-call path (mirrors the PyTorch module's call pattern; state carried across calls).
    neuron2 = PLIF(tau=tau, v_threshold=v_th0, v_reset=v_reset)
    spikes_step = jnp.stack([neuron2(dv_seq[t]) for t in range(T)])
    spikes_step = jax.block_until_ready(spikes_step)

    # Bandwidth-optimized path: bf16 dv in, bf16 spikes out (values are exactly 0/1).
    dv_bf16 = dv_seq.astype(jnp.bfloat16)
    neuron3 = PLIF(tau=tau, v_threshold=v_th0, v_reset=v_reset)
    spikes_bf16 = jax.block_until_ready(neuron3.forward_sequence(dv_bf16))

    ref_f32 = _ref_plif_sequence(dv_seq, tau, v_th0, v_reset)
    ref_bf16 = _ref_plif_sequence(dv_bf16, tau, v_th0, v_reset)

    assert spikes_fused.shape == (T, B, C, H, W)
    assert spikes_fused.dtype == jnp.float32
    assert jnp.array_equal(spikes_fused, ref_f32), "fused-T kernel mismatch vs reference"
    assert jnp.array_equal(spikes_step, ref_f32), "per-step kernel mismatch vs reference"
    assert spikes_bf16.dtype == jnp.bfloat16
    assert jnp.array_equal(spikes_bf16.astype(jnp.float32), ref_bf16), \
        "bf16-I/O kernel mismatch vs reference"

    print("KERNEL_OK")
</pallas_src>

<mosaic_0001>
module attributes {stable_mosaic.version = 11 : i64} {
  func.func @_plif_kernel(%arg0: i32, %arg1: i32, %arg2: memref<8x16x128xf32, #tpu.memory_space<vmem>>, %arg3: memref<16x128xf32, #tpu.memory_space<any>>, %arg4: memref<16x128xf32, #tpu.memory_space<any>>, %arg5: memref<1xf32, #tpu.memory_space<smem>>, %arg6: memref<8x16x128xf32, #tpu.memory_space<vmem>>, %arg7: memref<16x128xf32, #tpu.memory_space<any>>, %arg8: memref<16x128xf32, #tpu.memory_space<any>>, %arg9: memref<16x128xf32, #tpu.memory_space<vmem>>, %arg10: memref<16x128xf32, #tpu.memory_space<vmem>>) attributes {dimension_semantics = [#tpu.dimension_semantics<parallel>, #tpu.dimension_semantics<arbitrary>], iteration_bounds = array<i64: 1, 1>, scalar_prefetch = 0 : i64, scratch_operands = 2 : i64, tpu.core_type = #tpu.core_type<tc>, window_params = [{transform_indices = @transform_0, window_bounds = array<i64: 8, 16, 128>}, {}, {}, {transform_indices = @transform_3, window_bounds = array<i64: 1>}, {transform_indices = @transform_4, window_bounds = array<i64: 8, 16, 128>}, {}, {}]} {
    %c16_i32 = arith.constant 16 : i32
    %0 = arith.muli %arg0, %c16_i32 : i32
    %1 = tpu.assume_multiple %0, 16 : i32
    %c0_i32 = arith.constant 0 : i32
    %2 = arith.cmpi eq, %arg1, %c0_i32 : i32
    %3 = arith.extui %2 : i1 to i32
    %c0_i32_0 = arith.constant 0 : i32
    %4 = arith.cmpi ne, %3, %c0_i32_0 : i32
    scf.if %4 {
      "tpu.region"() ({
        %209 = tpu.sem_alloc : memref<!tpu.dma_semaphore, #tpu.memory_space<semaphore_mem>>
        %c0_i32_139 = arith.constant 0 : i32
        %210 = tpu.memref_slice %arg3[%1, %c0_i32_139] : memref<16x128xf32, #tpu.memory_space<any>> -> memref<16x128xf32, #tpu.memory_space<any>>
        tpu.enqueue_dma source(%210 : memref<16x128xf32, #tpu.memory_space<any>>) target(%arg9 : memref<16x128xf32, #tpu.memory_space<vmem>>) target_semaphore(%209 : memref<!tpu.dma_semaphore, #tpu.memory_space<semaphore_mem>>)
        %c0_i32_140 = arith.constant 0 : i32
        %211 = tpu.memref_slice %arg3[%1, %c0_i32_140] : memref<16x128xf32, #tpu.memory_space<any>> -> memref<16x128xf32, #tpu.memory_space<any>>
        tpu.wait_dma2 semaphore(%209 : memref<!tpu.dma_semaphore, #tpu.memory_space<semaphore_mem>>) src(%211 : memref<16x128xf32, #tpu.memory_space<any>>) dst(%arg9 : memref<16x128xf32, #tpu.memory_space<vmem>>)
        tpu.yield
      }) : () -> ()
      "tpu.region"() ({
        %209 = tpu.sem_alloc : memref<!tpu.dma_semaphore, #tpu.memory_space<semaphore_mem>>
        %c0_i32_139 = arith.constant 0 : i32
        %210 = tpu.memref_slice %arg4[%1, %c0_i32_139] : memref<16x128xf32, #tpu.memory_space<any>> -> memref<16x128xf32, #tpu.memory_space<any>>
        tpu.enqueue_dma source(%210 : memref<16x128xf32, #tpu.memory_space<any>>) target(%arg10 : memref<16x128xf32, #tpu.memory_space<vmem>>) target_semaphore(%209 : memref<!tpu.dma_semaphore, #tpu.memory_space<semaphore_mem>>)
        %c0_i32_140 = arith.constant 0 : i32
        %211 = tpu.memref_slice %arg4[%1, %c0_i32_140] : memref<16x128xf32, #tpu.memory_space<any>> -> memref<16x128xf32, #tpu.memory_space<any>>
        tpu.wait_dma2 semaphore(%209 : memref<!tpu.dma_semaphore, #tpu.memory_space<semaphore_mem>>) src(%211 : memref<16x128xf32, #tpu.memory_space<any>>) dst(%arg10 : memref<16x128xf32, #tpu.memory_space<vmem>>)
        tpu.yield
      }) : () -> ()
    } else {
    }
    %c0 = arith.constant 0 : index
    %5 = memref.load %arg5[%c0] : memref<1xf32, #tpu.memory_space<smem>>
    %c0_1 = arith.constant 0 : index
    %c0_2 = arith.constant 0 : index
    %c0_3 = arith.constant 0 : index
    %6 = vector.load %arg2[%c0_1, %c0_2, %c0_3] : memref<8x16x128xf32, #tpu.memory_space<vmem>>, vector<1x16x128xf32>
    %7 = vector.shape_cast %6 : vector<1x16x128xf32> to vector<16x128xf32>
    %c0_4 = arith.constant 0 : index
    %c0_5 = arith.constant 0 : index
    %8 = vector.load %arg9[%c0_4, %c0_5] : memref<16x128xf32, #tpu.memory_space<vmem>>, vector<16x128xf32>
    %c0_6 = arith.constant 0 : index
    %c0_7 = arith.constant 0 : index
    %9 = vector.load %arg10[%c0_6, %c0_7] : memref<16x128xf32, #tpu.memory_space<vmem>>, vector<16x128xf32>
    %cst = arith.constant 0.000000e+00 : f32
    %10 = vector.broadcast %cst : f32 to vector<16x128xf32>
    %11 = arith.subf %8, %10 : vector<16x128xf32>
    %12 = arith.subf %7, %11 : vector<16x128xf32>
    %13 = vector.broadcast %5 : f32 to vector<16x128xf32>
    %14 = arith.divf %12, %13 : vector<16x128xf32>
    %15 = arith.addf %8, %14 : vector<16x128xf32>
    %16 = arith.cmpf ogt, %15, %9 : vector<16x128xf32>
    %17 = arith.extui %16 : vector<16x128xi1> to vector<16x128xi32>
    %18 = arith.sitofp %17 : vector<16x128xi32> to vector<16x128xf32>
    %c0_8 = arith.constant 0 : index
    %c0_9 = arith.constant 0 : index
    %c0_10 = arith.constant 0 : index
    %19 = vector.load %arg6[%c0_8, %c0_9, %c0_10] : memref<8x16x128xf32, #tpu.memory_space<vmem>>, vector<1x16x128xf32>
    %20 = vector.shape_cast %19 : vector<1x16x128xf32> to vector<16x128xf32>
    %21 = vector.shape_cast %18 : vector<16x128xf32> to vector<1x16x128xf32>
    tpu.vector_store %arg6[%c0_8, %c0_9, %c0_10], %21 {strides = array<i32>} : memref<8x16x128xf32, #tpu.memory_space<vmem>>, vector<1x16x128xf32>,
    %cst_11 = arith.constant 0.000000e+00 : f32
    %22 = vector.broadcast %cst_11 : f32 to vector<16x128xf32>
    %23 = arith.select %16, %22, %15 : vector<16x128xi1>, vector<16x128xf32>
    %c0_12 = arith.constant 0 : index
    %c0_13 = arith.constant 0 : index
    %24 = vector.load %arg9[%c0_12, %c0_13] : memref<16x128xf32, #tpu.memory_space<vmem>>, vector<16x128xf32>
    tpu.vector_store %arg9[%c0_12, %c0_13], %23 {strides = array<i32>} : memref<16x128xf32, #tpu.memory_space<vmem>>, vector<16x128xf32>,
    %cst_14 = arith.constant 0.699999988 : f32
    %25 = vector.broadcast %cst_14 : f32 to vector<16x128xf32>
    %26 = arith.mulf %9, %25 : vector<16x128xf32>
    %cst_15 = arith.constant 2.000000e-01 : f32
    %27 = vector.broadcast %cst_15 : f32 to vector<16x128xf32>
    %28 = arith.addf %27, %26 : vector<16x128xf32>
    %29 = arith.select %16, %28, %26 : vector<16x128xi1>, vector<16x128xf32>
    %c0_16 = arith.constant 0 : index
    %c0_17 = arith.constant 0 : index
    %30 = vector.load %arg10[%c0_16, %c0_17] : memref<16x128xf32, #tpu.memory_space<vmem>>, vector<16x128xf32>
    tpu.vector_store %arg10[%c0_16, %c0_17], %29 {strides = array<i32>} : memref<16x128xf32, #tpu.memory_space<vmem>>, vector<16x128xf32>,
    %c1 = arith.constant 1 : index
    %c0_18 = arith.constant 0 : index
    %c0_19 = arith.constant 0 : index
    %31 = vector.load %arg2[%c1, %c0_18, %c0_19] : memref<8x16x128xf32, #tpu.memory_space<vmem>>, vector<1x16x128xf32>
    %32 = vector.shape_cast %31 : vector<1x16x128xf32> to vector<16x128xf32>
    %c0_20 = arith.constant 0 : index
    %c0_21 = arith.constant 0 : index
    %33 = vector.load %arg9[%c0_20, %c0_21] : memref<16x128xf32, #tpu.memory_space<vmem>>, vector<16x128xf32>
    %c0_22 = arith.constant 0 : index
    %c0_23 = arith.constant 0 : index
    %34 = vector.load %arg10[%c0_22, %c0_23] : memref<16x128xf32, #tpu.memory_space<vmem>>, vector<16x128xf32>
    %cst_24 = arith.constant 0.000000e+00 : f32
    %35 = vector.broadcast %cst_24 : f32 to vector<16x128xf32>
    %36 = arith.subf %33, %35 : vector<16x128xf32>
    %37 = arith.subf %32, %36 : vector<16x128xf32>
    %38 = vector.broadcast %5 : f32 to vector<16x128xf32>
    %39 = arith.divf %37, %38 : vector<16x128xf32>
    %40 = arith.addf %33, %39 : vector<16x128xf32>
    %41 = arith.cmpf ogt, %40, %34 : vector<16x128xf32>
    %42 = arith.extui %41 : vector<16x128xi1> to vector<16x128xi32>
    %43 = arith.sitofp %42 : vector<16x128xi32> to vector<16x128xf32>
    %c1_25 = arith.constant 1 : index
    %c0_26 = arith.constant 0 : index
    %c0_27 = arith.constant 0 : index
    %44 = vector.load %arg6[%c1_25, %c0_26, %c0_27] : memref<8x16x128xf32, #tpu.memory_space<vmem>>, vector<1x16x128xf32>
    %45 = vector.shape_cast %44 : vector<1x16x128xf32> to vector<16x128xf32>
    %46 = vector.shape_cast %43 : vector<16x128xf32> to vector<1x16x128xf32>
    tpu.vector_store %arg6[%c1_25, %c0_26, %c0_27], %46 {strides = array<i32>} : memref<8x16x128xf32, #tpu.memory_space<vmem>>, vector<1x16x128xf32>,
    %cst_28 = arith.constant 0.000000e+00 : f32
    %47 = vector.broadcast %cst_28 : f32 to vector<16x128xf32>
    %48 = arith.select %41, %47, %40 : vector<16x128xi1>, vector<16x128xf32>
    %c0_29 = arith.constant 0 : index
    %c0_30 = arith.constant 0 : index
    %49 = vector.load %arg9[%c0_29, %c0_30] : memref<16x128xf32, #tpu.memory_space<vmem>>, vector<16x128xf32>
    tpu.vector_store %arg9[%c0_29, %c0_30], %48 {strides = array<i32>} : memref<16x128xf32, #tpu.memory_space<vmem>>, vector<16x128xf32>,
    %cst_31 = arith.constant 0.699999988 : f32
    %50 = vector.broadcast %cst_31 : f32 to vector<16x128xf32>
    %51 = arith.mulf %34, %50 : vector<16x128xf32>
    %cst_32 = arith.constant 2.000000e-01 : f32
    %52 = vector.broadcast %cst_32 : f32 to vector<16x128xf32>
    %53 = arith.addf %52, %51 : vector<16x128xf32>
    %54 = arith.select %41, %53, %51 : vector<16x128xi1>, vector<16x128xf32>
    %c0_33 = arith.constant 0 : index
    %c0_34 = arith.constant 0 : index
    %55 = vector.load %arg10[%c0_33, %c0_34] : memref<16x128xf32, #tpu.memory_space<vmem>>, vector<16x128xf32>
    tpu.vector_store %arg10[%c0_33, %c0_34], %54 {strides = array<i32>} : memref<16x128xf32, #tpu.memory_space<vmem>>, vector<16x128xf32>,
    %c2 = arith.constant 2 : index
    %c0_35 = arith.constant 0 : index
    %c0_36 = arith.constant 0 : index
    %56 = vector.load %arg2[%c2, %c0_35, %c0_36] : memref<8x16x128xf32, #tpu.memory_space<vmem>>, vector<1x16x128xf32>
    %57 = vector.shape_cast %56 : vector<1x16x128xf32> to vector<16x128xf32>
    %c0_37 = arith.constant 0 : index
    %c0_38 = arith.constant 0 : index
    %58 = vector.load %arg9[%c0_37, %c0_38] : memref<16x128xf32, #tpu.memory_space<vmem>>, vector<16x128xf32>
    %c0_39 = arith.constant 0 : index
    %c0_40 = arith.constant 0 : index
    %59 = vector.load %arg10[%c0_39, %c0_40] : memref<16x128xf32, #tpu.memory_space<vmem>>, vector<16x128xf32>
    %cst_41 = arith.constant 0.000000e+00 : f32
    %60 = vector.broadcast %cst_41 : f32 to vector<16x128xf32>
    %61 = arith.subf %58, %60 : vector<16x128xf32>
    %62 = arith.subf %57, %61 : vector<16x128xf32>
    %63 = vector.broadcast %5 : f32 to vector<16x128xf32>
    %64 = arith.divf %62, %63 : vector<16x128xf32>
    %65 = arith.addf %58, %64 : vector<16x128xf32>
    %66 = arith.cmpf ogt, %65, %59 : vector<16x128xf32>
    %67 = arith.extui %66 : vector<16x128xi1> to vector<16x128xi32>
    %68 = arith.sitofp %67 : vector<16x128xi32> to vector<16x128xf32>
    %c2_42 = arith.constant 2 : index
    %c0_43 = arith.constant 0 : index
    %c0_44 = arith.constant 0 : index
    %69 = vector.load %arg6[%c2_42, %c0_43, %c0_44] : memref<8x16x128xf32, #tpu.memory_space<vmem>>, vector<1x16x128xf32>
    %70 = vector.shape_cast %69 : vector<1x16x128xf32> to vector<16x128xf32>
    %71 = vector.shape_cast %68 : vector<16x128xf32> to vector<1x16x128xf32>
    tpu.vector_store %arg6[%c2_42, %c0_43, %c0_44], %71 {strides = array<i32>} : memref<8x16x128xf32, #tpu.memory_space<vmem>>, vector<1x16x128xf32>,
    %cst_45 = arith.constant 0.000000e+00 : f32
    %72 = vector.broadcast %cst_45 : f32 to vector<16x128xf32>
    %73 = arith.select %66, %72, %65 : vector<16x128xi1>, vector<16x128xf32>
    %c0_46 = arith.constant 0 : index
    %c0_47 = arith.constant 0 : index
    %74 = vector.load %arg9[%c0_46, %c0_47] : memref<16x128xf32, #tpu.memory_space<vmem>>, vector<16x128xf32>
    tpu.vector_store %arg9[%c0_46, %c0_47], %73 {strides = array<i32>} : memref<16x128xf32, #tpu.memory_space<vmem>>, vector<16x128xf32>,
    %cst_48 = arith.constant 0.699999988 : f32
    %75 = vector.broadcast %cst_48 : f32 to vector<16x128xf32>
    %76 = arith.mulf %59, %75 : vector<16x128xf32>
    %cst_49 = arith.constant 2.000000e-01 : f32
    %77 = vector.broadcast %cst_49 : f32 to vector<16x128xf32>
    %78 = arith.addf %77, %76 : vector<16x128xf32>
    %79 = arith.select %66, %78, %76 : vector<16x128xi1>, vector<16x128xf32>
    %c0_50 = arith.constant 0 : index
    %c0_51 = arith.constant 0 : index
    %80 = vector.load %arg10[%c0_50, %c0_51] : memref<16x128xf32, #tpu.memory_space<vmem>>, vector<16x128xf32>
    tpu.vector_store %arg10[%c0_50, %c0_51], %79 {strides = array<i32>} : memref<16x128xf32, #tpu.memory_space<vmem>>, vector<16x128xf32>,
    %c3 = arith.constant 3 : index
    %c0_52 = arith.constant 0 : index
    %c0_53 = arith.constant 0 : index
    %81 = vector.load %arg2[%c3, %c0_52, %c0_53] : memref<8x16x128xf32, #tpu.memory_space<vmem>>, vector<1x16x128xf32>
    %82 = vector.shape_cast %81 : vector<1x16x128xf32> to vector<16x128xf32>
    %c0_54 = arith.constant 0 : index
    %c0_55 = arith.constant 0 : index
    %83 = vector.load %arg9[%c0_54, %c0_55] : memref<16x128xf32, #tpu.memory_space<vmem>>, vector<16x128xf32>
    %c0_56 = arith.constant 0 : index
    %c0_57 = arith.constant 0 : index
    %84 = vector.load %arg10[%c0_56, %c0_57] : memref<16x128xf32, #tpu.memory_space<vmem>>, vector<16x128xf32>
    %cst_58 = arith.constant 0.000000e+00 : f32
    %85 = vector.broadcast %cst_58 : f32 to vector<16x128xf32>
    %86 = arith.subf %83, %85 : vector<16x128xf32>
    %87 = arith.subf %82, %86 : vector<16x128xf32>
    %88 = vector.broadcast %5 : f32 to vector<16x128xf32>
    %89 = arith.divf %87, %88 : vector<16x128xf32>
    %90 = arith.addf %83, %89 : vector<16x128xf32>
    %91 = arith.cmpf ogt, %90, %84 : vector<16x128xf32>
    %92 = arith.extui %91 : vector<16x128xi1> to vector<16x128xi32>
    %93 = arith.sitofp %92 : vector<16x128xi32> to vector<16x128xf32>
    %c3_59 = arith.constant 3 : index
    %c0_60 = arith.constant 0 : index
    %c0_61 = arith.constant 0 : index
    %94 = vector.load %arg6[%c3_59, %c0_60, %c0_61] : memref<8x16x128xf32, #tpu.memory_space<vmem>>, vector<1x16x128xf32>
    %95 = vector.shape_cast %94 : vector<1x16x128xf32> to vector<16x128xf32>
    %96 = vector.shape_cast %93 : vector<16x128xf32> to vector<1x16x128xf32>
    tpu.vector_store %arg6[%c3_59, %c0_60, %c0_61], %96 {strides = array<i32>} : memref<8x16x128xf32, #tpu.memory_space<vmem>>, vector<1x16x128xf32>,
    %cst_62 = arith.constant 0.000000e+00 : f32
    %97 = vector.broadcast %cst_62 : f32 to vector<16x128xf32>
    %98 = arith.select %91, %97, %90 : vector<16x128xi1>, vector<16x128xf32>
    %c0_63 = arith.constant 0 : index
    %c0_64 = arith.constant 0 : index
    %99 = vector.load %arg9[%c0_63, %c0_64] : memref<16x128xf32, #tpu.memory_space<vmem>>, vector<16x128xf32>
    tpu.vector_store %arg9[%c0_63, %c0_64], %98 {strides = array<i32>} : memref<16x128xf32, #tpu.memory_space<vmem>>, vector<16x128xf32>,
    %cst_65 = arith.constant 0.699999988 : f32
    %100 = vector.broadcast %cst_65 : f32 to vector<16x128xf32>
    %101 = arith.mulf %84, %100 : vector<16x128xf32>
    %cst_66 = arith.constant 2.000000e-01 : f32
    %102 = vector.broadcast %cst_66 : f32 to vector<16x128xf32>
    %103 = arith.addf %102, %101 : vector<16x128xf32>
    %104 = arith.select %91, %103, %101 : vector<16x128xi1>, vector<16x128xf32>
    %c0_67 = arith.constant 0 : index
    %c0_68 = arith.constant 0 : index
    %105 = vector.load %arg10[%c0_67, %c0_68] : memref<16x128xf32, #tpu.memory_space<vmem>>, vector<16x128xf32>
    tpu.vector_store %arg10[%c0_67, %c0_68], %104 {strides = array<i32>} : memref<16x128xf32, #tpu.memory_space<vmem>>, vector<16x128xf32>,
    %c4 = arith.constant 4 : index
    %c0_69 = arith.constant 0 : index
    %c0_70 = arith.constant 0 : index
    %106 = vector.load %arg2[%c4, %c0_69, %c0_70] : memref<8x16x128xf32, #tpu.memory_space<vmem>>, vector<1x16x128xf32>
    %107 = vector.shape_cast %106 : vector<1x16x128xf32> to vector<16x128xf32>
    %c0_71 = arith.constant 0 : index
    %c0_72 = arith.constant 0 : index
    %108 = vector.load %arg9[%c0_71, %c0_72] : memref<16x128xf32, #tpu.memory_space<vmem>>, vector<16x128xf32>
    %c0_73 = arith.constant 0 : index
    %c0_74 = arith.constant 0 : index
    %109 = vector.load %arg10[%c0_73, %c0_74] : memref<16x128xf32, #tpu.memory_space<vmem>>, vector<16x128xf32>
    %cst_75 = arith.constant 0.000000e+00 : f32
    %110 = vector.broadcast %cst_75 : f32 to vector<16x128xf32>
    %111 = arith.subf %108, %110 : vector<16x128xf32>
    %112 = arith.subf %107, %111 : vector<16x128xf32>
    %113 = vector.broadcast %5 : f32 to vector<16x128xf32>
    %114 = arith.divf %112, %113 : vector<16x128xf32>
    %115 = arith.addf %108, %114 : vector<16x128xf32>
    %116 = arith.cmpf ogt, %115, %109 : vector<16x128xf32>
    %117 = arith.extui %116 : vector<16x128xi1> to vector<16x128xi32>
    %118 = arith.sitofp %117 : vector<16x128xi32> to vector<16x128xf32>
    %c4_76 = arith.constant 4 : index
    %c0_77 = arith.constant 0 : index
    %c0_78 = arith.constant 0 : index
    %119 = vector.load %arg6[%c4_76, %c0_77, %c0_78] : memref<8x16x128xf32, #tpu.memory_space<vmem>>, vector<1x16x128xf32>
    %120 = vector.shape_cast %119 : vector<1x16x128xf32> to vector<16x128xf32>
    %121 = vector.shape_cast %118 : vector<16x128xf32> to vector<1x16x128xf32>
    tpu.vector_store %arg6[%c4_76, %c0_77, %c0_78], %121 {strides = array<i32>} : memref<8x16x128xf32, #tpu.memory_space<vmem>>, vector<1x16x128xf32>,
    %cst_79 = arith.constant 0.000000e+00 : f32
    %122 = vector.broadcast %cst_79 : f32 to vector<16x128xf32>
    %123 = arith.select %116, %122, %115 : vector<16x128xi1>, vector<16x128xf32>
    %c0_80 = arith.constant 0 : index
    %c0_81 = arith.constant 0 : index
    %124 = vector.load %arg9[%c0_80, %c0_81] : memref<16x128xf32, #tpu.memory_space<vmem>>, vector<16x128xf32>
    tpu.vector_store %arg9[%c0_80, %c0_81], %123 {strides = array<i32>} : memref<16x128xf32, #tpu.memory_space<vmem>>, vector<16x128xf32>,
    %cst_82 = arith.constant 0.699999988 : f32
    %125 = vector.broadcast %cst_82 : f32 to vector<16x128xf32>
    %126 = arith.mulf %109, %125 : vector<16x128xf32>
    %cst_83 = arith.constant 2.000000e-01 : f32
    %127 = vector.broadcast %cst_83 : f32 to vector<16x128xf32>
    %128 = arith.addf %127, %126 : vector<16x128xf32>
    %129 = arith.select %116, %128, %126 : vector<16x128xi1>, vector<16x128xf32>
    %c0_84 = arith.constant 0 : index
    %c0_85 = arith.constant 0 : index
    %130 = vector.load %arg10[%c0_84, %c0_85] : memref<16x128xf32, #tpu.memory_space<vmem>>, vector<16x128xf32>
    tpu.vector_store %arg10[%c0_84, %c0_85], %129 {strides = array<i32>} : memref<16x128xf32, #tpu.memory_space<vmem>>, vector<16x128xf32>,
    %c5 = arith.constant 5 : index
    %c0_86 = arith.constant 0 : index
    %c0_87 = arith.constant 0 : index
    %131 = vector.load %arg2[%c5, %c0_86, %c0_87] : memref<8x16x128xf32, #tpu.memory_space<vmem>>, vector<1x16x128xf32>
    %132 = vector.shape_cast %131 : vector<1x16x128xf32> to vector<16x128xf32>
    %c0_88 = arith.constant 0 : index
    %c0_89 = arith.constant 0 : index
    %133 = vector.load %arg9[%c0_88, %c0_89] : memref<16x128xf32, #tpu.memory_space<vmem>>, vector<16x128xf32>
    %c0_90 = arith.constant 0 : index
    %c0_91 = arith.constant 0 : index
    %134 = vector.load %arg10[%c0_90, %c0_91] : memref<16x128xf32, #tpu.memory_space<vmem>>, vector<16x128xf32>
    %cst_92 = arith.constant 0.000000e+00 : f32
    %135 = vector.broadcast %cst_92 : f32 to vector<16x128xf32>
    %136 = arith.subf %133, %135 : vector<16x128xf32>
    %137 = arith.subf %132, %136 : vector<16x128xf32>
    %138 = vector.broadcast %5 : f32 to vector<16x128xf32>
    %139 = arith.divf %137, %138 : vector<16x128xf32>
    %140 = arith.addf %133, %139 : vector<16x128xf32>
    %141 = arith.cmpf ogt, %140, %134 : vector<16x128xf32>
    %142 = arith.extui %141 : vector<16x128xi1> to vector<16x128xi32>
    %143 = arith.sitofp %142 : vector<16x128xi32> to vector<16x128xf32>
    %c5_93 = arith.constant 5 : index
    %c0_94 = arith.constant 0 : index
    %c0_95 = arith.constant 0 : index
    %144 = vector.load %arg6[%c5_93, %c0_94, %c0_95] : memref<8x16x128xf32, #tpu.memory_space<vmem>>, vector<1x16x128xf32>
    %145 = vector.shape_cast %144 : vector<1x16x128xf32> to vector<16x128xf32>
    %146 = vector.shape_cast %143 : vector<16x128xf32> to vector<1x16x128xf32>
    tpu.vector_store %arg6[%c5_93, %c0_94, %c0_95], %146 {strides = array<i32>} : memref<8x16x128xf32, #tpu.memory_space<vmem>>, vector<1x16x128xf32>,
    %cst_96 = arith.constant 0.000000e+00 : f32
    %147 = vector.broadcast %cst_96 : f32 to vector<16x128xf32>
    %148 = arith.select %141, %147, %140 : vector<16x128xi1>, vector<16x128xf32>
    %c0_97 = arith.constant 0 : index
    %c0_98 = arith.constant 0 : index
    %149 = vector.load %arg9[%c0_97, %c0_98] : memref<16x128xf32, #tpu.memory_space<vmem>>, vector<16x128xf32>
    tpu.vector_store %arg9[%c0_97, %c0_98], %148 {strides = array<i32>} : memref<16x128xf32, #tpu.memory_space<vmem>>, vector<16x128xf32>,
    %cst_99 = arith.constant 0.699999988 : f32
    %150 = vector.broadcast %cst_99 : f32 to vector<16x128xf32>
    %151 = arith.mulf %134, %150 : vector<16x128xf32>
    %cst_100 = arith.constant 2.000000e-01 : f32
    %152 = vector.broadcast %cst_100 : f32 to vector<16x128xf32>
    %153 = arith.addf %152, %151 : vector<16x128xf32>
    %154 = arith.select %141, %153, %151 : vector<16x128xi1>, vector<16x128xf32>
    %c0_101 = arith.constant 0 : index
    %c0_102 = arith.constant 0 : index
    %155 = vector.load %arg10[%c0_101, %c0_102] : memref<16x128xf32, #tpu.memory_space<vmem>>, vector<16x128xf32>
    tpu.vector_store %arg10[%c0_101, %c0_102], %154 {strides = array<i32>} : memref<16x128xf32, #tpu.memory_space<vmem>>, vector<16x128xf32>,
    %c6 = arith.constant 6 : index
    %c0_103 = arith.constant 0 : index
    %c0_104 = arith.constant 0 : index
    %156 = vector.load %arg2[%c6, %c0_103, %c0_104] : memref<8x16x128xf32, #tpu.memory_space<vmem>>, vector<1x16x128xf32>
    %157 = vector.shape_cast %156 : vector<1x16x128xf32> to vector<16x128xf32>
    %c0_105 = arith.constant 0 : index
    %c0_106 = arith.constant 0 : index
    %158 = vector.load %arg9[%c0_105, %c0_106] : memref<16x128xf32, #tpu.memory_space<vmem>>, vector<16x128xf32>
    %c0_107 = arith.constant 0 : index
    %c0_108 = arith.constant 0 : index
    %159 = vector.load %arg10[%c0_107, %c0_108] : memref<16x128xf32, #tpu.memory_space<vmem>>, vector<16x128xf32>
    %cst_109 = arith.constant 0.000000e+00 : f32
    %160 = vector.broadcast %cst_109 : f32 to vector<16x128xf32>
    %161 = arith.subf %158, %160 : vector<16x128xf32>
    %162 = arith.subf %157, %161 : vector<16x128xf32>
    %163 = vector.broadcast %5 : f32 to vector<16x128xf32>
    %164 = arith.divf %162, %163 : vector<16x128xf32>
    %165 = arith.addf %158, %164 : vector<16x128xf32>
    %166 = arith.cmpf ogt, %165, %159 : vector<16x128xf32>
    %167 = arith.extui %166 : vector<16x128xi1> to vector<16x128xi32>
    %168 = arith.sitofp %167 : vector<16x128xi32> to vector<16x128xf32>
    %c6_110 = arith.constant 6 : index
    %c0_111 = arith.constant 0 : index
    %c0_112 = arith.constant 0 : index
    %169 = vector.load %arg6[%c6_110, %c0_111, %c0_112] : memref<8x16x128xf32, #tpu.memory_space<vmem>>, vector<1x16x128xf32>
    %170 = vector.shape_cast %169 : vector<1x16x128xf32> to vector<16x128xf32>
    %171 = vector.shape_cast %168 : vector<16x128xf32> to vector<1x16x128xf32>
    tpu.vector_store %arg6[%c6_110, %c0_111, %c0_112], %171 {strides = array<i32>} : memref<8x16x128xf32, #tpu.memory_space<vmem>>, vector<1x16x128xf32>,
    %cst_113 = arith.constant 0.000000e+00 : f32
    %172 = vector.broadcast %cst_113 : f32 to vector<16x128xf32>
    %173 = arith.select %166, %172, %165 : vector<16x128xi1>, vector<16x128xf32>
    %c0_114 = arith.constant 0 : index
    %c0_115 = arith.constant 0 : index
    %174 = vector.load %arg9[%c0_114, %c0_115] : memref<16x128xf32, #tpu.memory_space<vmem>>, vector<16x128xf32>
    tpu.vector_store %arg9[%c0_114, %c0_115], %173 {strides = array<i32>} : memref<16x128xf32, #tpu.memory_space<vmem>>, vector<16x128xf32>,
    %cst_116 = arith.constant 0.699999988 : f32
    %175 = vector.broadcast %cst_116 : f32 to vector<16x128xf32>
    %176 = arith.mulf %159, %175 : vector<16x128xf32>
    %cst_117 = arith.constant 2.000000e-01 : f32
    %177 = vector.broadcast %cst_117 : f32 to vector<16x128xf32>
    %178 = arith.addf %177, %176 : vector<16x128xf32>
    %179 = arith.select %166, %178, %176 : vector<16x128xi1>, vector<16x128xf32>
    %c0_118 = arith.constant 0 : index
    %c0_119 = arith.constant 0 : index
    %180 = vector.load %arg10[%c0_118, %c0_119] : memref<16x128xf32, #tpu.memory_space<vmem>>, vector<16x128xf32>
    tpu.vector_store %arg10[%c0_118, %c0_119], %179 {strides = array<i32>} : memref<16x128xf32, #tpu.memory_space<vmem>>, vector<16x128xf32>,
    %c7 = arith.constant 7 : index
    %c0_120 = arith.constant 0 : index
    %c0_121 = arith.constant 0 : index
    %181 = vector.load %arg2[%c7, %c0_120, %c0_121] : memref<8x16x128xf32, #tpu.memory_space<vmem>>, vector<1x16x128xf32>
    %182 = vector.shape_cast %181 : vector<1x16x128xf32> to vector<16x128xf32>
    %c0_122 = arith.constant 0 : index
    %c0_123 = arith.constant 0 : index
    %183 = vector.load %arg9[%c0_122, %c0_123] : memref<16x128xf32, #tpu.memory_space<vmem>>, vector<16x128xf32>
    %c0_124 = arith.constant 0 : index
    %c0_125 = arith.constant 0 : index
    %184 = vector.load %arg10[%c0_124, %c0_125] : memref<16x128xf32, #tpu.memory_space<vmem>>, vector<16x128xf32>
    %cst_126 = arith.constant 0.000000e+00 : f32
    %185 = vector.broadcast %cst_126 : f32 to vector<16x128xf32>
    %186 = arith.subf %183, %185 : vector<16x128xf32>
    %187 = arith.subf %182, %186 : vector<16x128xf32>
    %188 = vector.broadcast %5 : f32 to vector<16x128xf32>
    %189 = arith.divf %187, %188 : vector<16x128xf32>
    %190 = arith.addf %183, %189 : vector<16x128xf32>
    %191 = arith.cmpf ogt, %190, %184 : vector<16x128xf32>
    %192 = arith.extui %191 : vector<16x128xi1> to vector<16x128xi32>
    %193 = arith.sitofp %192 : vector<16x128xi32> to vector<16x128xf32>
    %c7_127 = arith.constant 7 : index
    %c0_128 = arith.constant 0 : index
    %c0_129 = arith.constant 0 : index
    %194 = vector.load %arg6[%c7_127, %c0_128, %c0_129] : memref<8x16x128xf32, #tpu.memory_space<vmem>>, vector<1x16x128xf32>
    %195 = vector.shape_cast %194 : vector<1x16x128xf32> to vector<16x128xf32>
    %196 = vector.shape_cast %193 : vector<16x128xf32> to vector<1x16x128xf32>
    tpu.vector_store %arg6[%c7_127, %c0_128, %c0_129], %196 {strides = array<i32>} : memref<8x16x128xf32, #tpu.memory_space<vmem>>, vector<1x16x128xf32>,
    %cst_130 = arith.constant 0.000000e+00 : f32
    %197 = vector.broadcast %cst_130 : f32 to vector<16x128xf32>
    %198 = arith.select %191, %197, %190 : vector<16x128xi1>, vector<16x128xf32>
    %c0_131 = arith.constant 0 : index
    %c0_132 = arith.constant 0 : index
    %199 = vector.load %arg9[%c0_131, %c0_132] : memref<16x128xf32, #tpu.memory_space<vmem>>, vector<16x128xf32>
    tpu.vector_store %arg9[%c0_131, %c0_132], %198 {strides = array<i32>} : memref<16x128xf32, #tpu.memory_space<vmem>>, vector<16x128xf32>,
    %cst_133 = arith.constant 0.699999988 : f32
    %200 = vector.broadcast %cst_133 : f32 to vector<16x128xf32>
    %201 = arith.mulf %184, %200 : vector<16x128xf32>
    %cst_134 = arith.constant 2.000000e-01 : f32
    %202 = vector.broadcast %cst_134 : f32 to vector<16x128xf32>
    %203 = arith.addf %202, %201 : vector<16x128xf32>
    %204 = arith.select %191, %203, %201 : vector<16x128xi1>, vector<16x128xf32>
    %c0_135 = arith.constant 0 : index
    %c0_136 = arith.constant 0 : index
    %205 = vector.load %arg10[%c0_135, %c0_136] : memref<16x128xf32, #tpu.memory_space<vmem>>, vector<16x128xf32>
    tpu.vector_store %arg10[%c0_135, %c0_136], %204 {strides = array<i32>} : memref<16x128xf32, #tpu.memory_space<vmem>>, vector<16x128xf32>,
    %c0_i32_137 = arith.constant 0 : i32
    %206 = arith.cmpi eq, %arg1, %c0_i32_137 : i32
    %207 = arith.extui %206 : i1 to i32
    %c0_i32_138 = arith.constant 0 : i32
    %208 = arith.cmpi ne, %207, %c0_i32_138 : i32
    scf.if %208 {
      "tpu.region"() ({
        %209 = tpu.sem_alloc : memref<!tpu.dma_semaphore, #tpu.memory_space<semaphore_mem>>
        %c0_i32_139 = arith.constant 0 : i32
        %210 = tpu.memref_slice %arg7[%1, %c0_i32_139] : memref<16x128xf32, #tpu.memory_space<any>> -> memref<16x128xf32, #tpu.memory_space<any>>
        tpu.enqueue_dma source(%arg9 : memref<16x128xf32, #tpu.memory_space<vmem>>) target(%210 : memref<16x128xf32, #tpu.memory_space<any>>) target_semaphore(%209 : memref<!tpu.dma_semaphore, #tpu.memory_space<semaphore_mem>>)
        %c0_i32_140 = arith.constant 0 : i32
        %211 = tpu.memref_slice %arg7[%1, %c0_i32_140] : memref<16x128xf32, #tpu.memory_space<any>> -> memref<16x128xf32, #tpu.memory_space<any>>
        tpu.wait_dma2 semaphore(%209 : memref<!tpu.dma_semaphore, #tpu.memory_space<semaphore_mem>>) src(%arg9 : memref<16x128xf32, #tpu.memory_space<vmem>>) dst(%211 : memref<16x128xf32, #tpu.memory_space<any>>)
        tpu.yield
      }) : () -> ()
      "tpu.region"() ({
        %209 = tpu.sem_alloc : memref<!tpu.dma_semaphore, #tpu.memory_space<semaphore_mem>>
        %c0_i32_139 = arith.constant 0 : i32
        %210 = tpu.memref_slice %arg8[%1, %c0_i32_139] : memref<16x128xf32, #tpu.memory_space<any>> -> memref<16x128xf32, #tpu.memory_space<any>>
        tpu.enqueue_dma source(%arg10 : memref<16x128xf32, #tpu.memory_space<vmem>>) target(%210 : memref<16x128xf32, #tpu.memory_space<any>>) target_semaphore(%209 : memref<!tpu.dma_semaphore, #tpu.memory_space<semaphore_mem>>)
        %c0_i32_140 = arith.constant 0 : i32
        %211 = tpu.memref_slice %arg8[%1, %c0_i32_140] : memref<16x128xf32, #tpu.memory_space<any>> -> memref<16x128xf32, #tpu.memory_space<any>>
        tpu.wait_dma2 semaphore(%209 : memref<!tpu.dma_semaphore, #tpu.memory_space<semaphore_mem>>) src(%arg10 : memref<16x128xf32, #tpu.memory_space<vmem>>) dst(%211 : memref<16x128xf32, #tpu.memory_space<any>>)
        tpu.yield
      }) : () -> ()
    } else {
    }
    return
  }
  func.func @transform_0(%arg0: i32, %arg1: i32) -> (i32, i32, i32) {
    %c0_i32 = arith.constant 0 : i32
    %c0_i32_0 = arith.constant 0 : i32
    return %arg1, %arg0, %c0_i32 : i32, i32, i32
  }
  func.func @transform_3(%arg0: i32, %arg1: i32) -> i32 {
    %c0_i32 = arith.constant 0 : i32
    %c0_i32_0 = arith.constant 0 : i32
    return %c0_i32 : i32
  }
  func.func @transform_4(%arg0: i32, %arg1: i32) -> (i32, i32, i32) {
    %c0_i32 = arith.constant 0 : i32
    %c0_i32_0 = arith.constant 0 : i32
    return %arg1, %arg0, %c0_i32 : i32, i32, i32
  }
}

</mosaic_0001>

<llo_original>
// kernel: plif_steps.1
$region0: #{plif_steps.1}
  #allocation0 [shape = 'u32[]', space=smem, size = 0x4, offset = 0x4, fixed_abs, tag = 'smem constant byte address 0x4 - core index']
  #allocation1 [shape = 'u32[144,128]{1,0:T(1,128)}', space=vmem, size = 0x12000, scoped, tag = 'internal scratch']
  #allocation2 [shape = 'f32[16,128]{1,0:T(8,128)}', space=vmem, size = 0x2000, scoped, tag = 'scratch operand']
  #allocation3 [shape = 'f32[16,128]{1,0:T(8,128)}', space=vmem, size = 0x2000, scoped, tag = 'scratch operand']
  #allocation4 [shape = 'f32[1]{0:T(128)S(6)}', space=smem, size = 0x200, scoped, tag = 'scoped memory for plif_steps.1']
  #allocation10 [shape = 's32[]', space=sflag, size = 0x4, offset = 0, fixed_abs, tag = 'sflag constant byte address 0x0 - dummy sync flag']
  #allocation11 [shape = 's32[]', space=sflag, size = 0x4, offset = 0, fixed_abs, tag = 'sflag constant byte address 0x0 - dummy sync flag']
  #allocation12 [shape = 'u32[]', space=smem, size = 0x4, offset = 0x44, fixed_abs, tag = 'smem constant byte address 0x44 - assertion arg 0']
  #allocation13 [shape = 'u32[]', space=smem, size = 0x4, offset = 0x48, fixed_abs, tag = 'smem constant byte address 0x48 - assertion arg 1']
  #allocation15 [shape = 's32[]', space=sflag, size = 0x4, offset = 0, fixed_abs, tag = 'sflag constant byte address 0x0 - dummy sync flag']
  #allocation16 [shape = 's32[]', space=sflag, size = 0x4, offset = 0, fixed_abs, tag = 'sflag constant byte address 0x0 - dummy sync flag']
  #allocation18 [shape = 's32[]', space=sflag, size = 0x4, offset = 0, fixed_abs, tag = 'sflag constant byte address 0x0 - dummy sync flag']
  #allocation19 [shape = 's32[]', space=sflag, size = 0x4, offset = 0, fixed_abs, tag = 'sflag constant byte address 0x0 - dummy sync flag']
  #allocation21 [shape = 's32[]', space=sflag, size = 0x4, offset = 0, fixed_abs, tag = 'sflag constant byte address 0x0 - dummy sync flag']
  #allocation22 [shape = 's32[]', space=sflag, size = 0x4, offset = 0, fixed_abs, tag = 'sflag constant byte address 0x0 - dummy sync flag']
  %s0 = inlined_call_operand.hbm [shape: f32[8,16,128], index: 0, kind: input, shape index: {}]
  %s1 = inlined_call_operand.hbm [shape: f32[16,128], index: 1, kind: input, shape index: {}, may-alias: {1,5}]
  %s2 = inlined_call_operand.hbm [shape: f32[16,128], index: 2, kind: input, shape index: {}, may-alias: {2,6}]
  %s3 = inlined_call_operand.<no memory space> [shape: f32[1], index: 3, kind: input, shape index: {}]
  %s4 = inlined_call_operand.hbm [shape: f32[8,16,128], index: 4, kind: output, shape index: {0}]
  %s5 = inlined_call_operand.hbm [shape: f32[16,128], index: 5, kind: output, shape index: {1}, may-alias: {1,5}]
  %s6 = inlined_call_operand.hbm [shape: f32[16,128], index: 6, kind: output, shape index: {2}, may-alias: {2,6}]
  %7 = xla_tuple %s4, %s5, %s6
  %s8 = sld [smem:[#allocation0]]
  $region50: #{plif_steps.1} parent=0
    _
  %s10 = ssub.s32 1, %s8
  %s11 = scalar_select 0, %s10, %s8
  %12 = sst [smem:[#allocation4]] %s3
  $region1: #{plif_steps.1} parent=0
    #allocation5 [shape = 'u8[65536]{0}', space=vmem, size = 0x10000, scoped, tag = 'input window, operand 0, single buffered']
    #allocation6 [shape = 's32[1]{0}', space=sflag, size = 0x4, scoped, tag = 'scoped memory for plif_steps.1']
    #allocation7 [shape = 's32[1]{0}', space=sflag, size = 0x4, scoped, tag = 'scoped memory for plif_steps.1']
    #allocation8 [shape = 'u8[65536]{0}', space=vmem, size = 0x10000, scoped, tag = 'output window, operand 0, single buffered']
    %13 = vsyncpa [#allocation6], 0
    %14 = vsyncpa [#allocation7], 0
    // Predicated region
    $region2: #{plif_steps.1} parent=1 // pred_check
      _
    $region3: #{plif_steps.1} parent=1 // pred_check_branch
      %16 = sbr.rel (0) target = $region5
    $region4: #{plif_steps.1} parent=1 // pred_region
      %s18 = ssub.s32 2048, 2048
      %19 = vsyncadd [#allocation6], %s18
      %s20 = sshll.u32 [#allocation5], 4
      %s21 = int_to_ptr.vmem [resolvable:$true] %s20
      %26 = dma.hbm_to_vmem [thread:$0]  %s0, 2048, %s21, [#allocation6], 128, 128, 8
    $region5: #{plif_steps.1} parent=1 // pred_fallthru
      _
    // Predicated region
    $region6: #{plif_steps.1} parent=1 // pred_check
      _
    $region7: #{plif_steps.1} parent=1 // pred_check_branch
      %28 = sbr.rel (0) target = $region9
    $region8: #{plif_steps.1} parent=1 // pred_region
      _
    $region9: #{plif_steps.1} parent=1 // pred_fallthru
      _
    // Predicated region
    $region10: #{plif_steps.1} parent=1 // pred_check
      _
    $region11: #{plif_steps.1} parent=1 // pred_check_branch
      %30 = sbr.rel (0) target = $region13
    $region12: #{plif_steps.1} parent=1 // pred_region
      %31 = dma.done [#allocation6], 2048
    $region13: #{plif_steps.1} parent=1 // pred_fallthru
      _
    %s32 = smul.u32 0, 16
    %p33 = scmp.eq.s32.totalorder 0, 0
    // Predicated region
    $region14: #{plif_steps.1} parent=1 // pred_check
      %p34 = pneg %p33
    $region15: #{plif_steps.1} parent=1 // pred_check_branch
      %36 = sbr.rel (%p34) target = $region17
    $region16: #{plif_steps.1} parent=1 // pred_region
      $region18: #{plif_steps.1} parent=16
        #allocation9 [shape = 's32[1]{0}', space=sflag, size = 0x4, scoped, tag = 'scoped memory for plif_steps.1']
        %s37 = smul.addr %s32, 16
        %s38 = scalar_lea.hbm %s1, %s37
        // Predicated region
        $region19: #{plif_steps.1} parent=18 // pred_check
          _
        $region20: #{plif_steps.1} parent=18 // pred_check_branch
          %40 = sbr.rel target = $region22
        $region21: #{plif_steps.1} parent=18 // pred_region
          %41 = sst [smem:[#allocation12]] [#allocation11]
          %42 = sst [smem:[#allocation13]] [#allocation10]
        $region22: #{plif_steps.1} parent=18 // pred_fallthru
          _
        %44 = shalt.err (0)
        %s46 = sshll.u32 [#allocation2], 4
        %s47 = int_to_ptr.vmem [resolvable:$true] %s46
        %49 = dma.hbm_to_vmem [thread:$0]  %s38, 256, %s47, [#allocation9]
        %s50 = smul.u32 16, 1
        %s51 = sshll.u32 %s50, 4
        %52 = dma.done [#allocation9], %s51
      $region23: #{plif_steps.1} parent=16
        #allocation14 [shape = 's32[1]{0}', space=sflag, size = 0x4, scoped, tag = 'scoped memory for plif_steps.1']
        %s53 = smul.addr %s32, 16
        %s54 = scalar_lea.hbm %s2, %s53
        // Predicated region
        $region24: #{plif_steps.1} parent=23 // pred_check
          _
        $region25: #{plif_steps.1} parent=23 // pred_check_branch
          %56 = sbr.rel target = $region27
        $region26: #{plif_steps.1} parent=23 // pred_region
          %57 = sst [smem:[#allocation12]] [#allocation16]
          %58 = sst [smem:[#allocation13]] [#allocation15]
        $region27: #{plif_steps.1} parent=23 // pred_fallthru
          _
        %60 = shalt.err (0)
        %s62 = sshll.u32 [#allocation3], 4
        %s63 = int_to_ptr.vmem [resolvable:$true] %s62
        %65 = dma.hbm_to_vmem [thread:$0]  %s54, 256, %s63, [#allocation14]
        %s66 = smul.u32 16, 1
        %s67 = sshll.u32 %s66, 4
        %68 = dma.done [#allocation14], %s67
    $region17: #{plif_steps.1} parent=1 // pred_fallthru
      _
    %s69 = sld [smem:[#allocation4]]
    %v70 = vld [vmem:[#allocation5] sm:$0xff]
    %v71 = vld [vmem:[#allocation5 + $0x8] sm:$0xff]
    %v72 = vld [vmem:[#allocation2] sm:$0xff]
    %v73 = vld [vmem:[#allocation2 + $0x8] sm:$0xff]
    %v74 = vld [vmem:[#allocation3] sm:$0xff]
    %v75 = vld [vmem:[#allocation3 + $0x8] sm:$0xff]
    %v76 = vsub.f32 %v70, %v72
    %v77 = vsub.f32 %v71, %v73
    %v78 = vstv %s69
    %v79 = vrcp.pop %v78
    %v80 = vmul.f32 %v76, %v79
    %v81 = vmul.f32 %v77, %v79
    %v82 = vadd.f32 %v72, %v80
    %v83 = vadd.f32 %v73, %v81
    %vm84 = vcmp.gt.f32.partialorder %v82, %v74
    %vm85 = vcmp.gt.f32.partialorder %v83, %v75
    %v86 = vsel %vm84, 1, 0
    %v87 = vsel %vm85, 1, 0
    %v88 = vcvt.s32.f32 %v86
    %v89 = vcvt.s32.f32 %v87
    %90 = vst [vmem:[#allocation8] sm:$0xff] %v88
    %91 = vst [vmem:[#allocation8 + $0x8] sm:$0xff] %v89
    %v92 = vsel %vm84, 0.0, %v82
    %v93 = vsel %vm85, 0.0, %v83
    %94 = vst [vmem:[#allocation2] sm:$0xff] %v92
    %95 = vst [vmem:[#allocation2 + $0x8] sm:$0xff] %v93
    %v96 = vmul.f32 %v74, 0.7
    %v97 = vmul.f32 %v75, 0.7
    %v98 = vadd.f32 %v96, 0.2
    %v99 = vadd.f32 %v97, 0.2
    %v100 = vsel %vm84, %v98, %v96
    %v101 = vsel %vm85, %v99, %v97
    %102 = vst [vmem:[#allocation3] sm:$0xff] %v100
    %103 = vst [vmem:[#allocation3 + $0x8] sm:$0xff] %v101
    %s104 = scalar_lea.vmem [#allocation5], 16
    %v105 = vld [vmem:[%s104] sm:$0xff]
    %v106 = vld [vmem:[%s104 + $0x8] sm:$0xff]
    %v107 = vld [vmem:[#allocation2] sm:$0xff]
    %v108 = vld [vmem:[#allocation2 + $0x8] sm:$0xff]
    %v109 = vld [vmem:[#allocation3] sm:$0xff]
    %v110 = vld [vmem:[#allocation3 + $0x8] sm:$0xff]
    %v111 = vsub.f32 %v105, %v107
    %v112 = vsub.f32 %v106, %v108
    %v113 = vmul.f32 %v111, %v79
    %v114 = vmul.f32 %v112, %v79
    %v115 = vadd.f32 %v107, %v113
    %v116 = vadd.f32 %v108, %v114
    %vm117 = vcmp.gt.f32.partialorder %v115, %v109
    %vm118 = vcmp.gt.f32.partialorder %v116, %v110
    %v119 = vsel %vm117, 1, 0
    %v120 = vsel %vm118, 1, 0
    %v121 = vcvt.s32.f32 %v119
    %v122 = vcvt.s32.f32 %v120
    %s123 = scalar_lea.vmem [#allocation8], 16
    %124 = vst [vmem:[%s123] sm:$0xff] %v121
    %125 = vst [vmem:[%s123 + $0x8] sm:$0xff] %v122
    %v126 = vsel %vm117, 0.0, %v115
    %v127 = vsel %vm118, 0.0, %v116
    %128 = vst [vmem:[#allocation2] sm:$0xff] %v126
    %129 = vst [vmem:[#allocation2 + $0x8] sm:$0xff] %v127
    %v130 = vmul.f32 %v109, 0.7
    %v131 = vmul.f32 %v110, 0.7
    %v132 = vadd.f32 %v130, 0.2
    %v133 = vadd.f32 %v131, 0.2
    %v134 = vsel %vm117, %v132, %v130
    %v135 = vsel %vm118, %v133, %v131
    %136 = vst [vmem:[#allocation3] sm:$0xff] %v134
    %137 = vst [vmem:[#allocation3 + $0x8] sm:$0xff] %v135
    %s138 = scalar_lea.vmem [#allocation5], 32
    %v139 = vld [vmem:[%s138] sm:$0xff]
    %v140 = vld [vmem:[%s138 + $0x8] sm:$0xff]
    %v141 = vld [vmem:[#allocation2] sm:$0xff]
    %v142 = vld [vmem:[#allocation2 + $0x8] sm:$0xff]
    %v143 = vld [vmem:[#allocation3] sm:$0xff]
    %v144 = vld [vmem:[#allocation3 + $0x8] sm:$0xff]
    %v145 = vsub.f32 %v139, %v141
    %v146 = vsub.f32 %v140, %v142
    %v147 = vmul.f32 %v145, %v79
    %v148 = vmul.f32 %v146, %v79
    %v149 = vadd.f32 %v141, %v147
    %v150 = vadd.f32 %v142, %v148
    %vm151 = vcmp.gt.f32.partialorder %v149, %v143
    %vm152 = vcmp.gt.f32.partialorder %v150, %v144
    %v153 = vsel %vm151, 1, 0
    %v154 = vsel %vm152, 1, 0
    %v155 = vcvt.s32.f32 %v153
    %v156 = vcvt.s32.f32 %v154
    %s157 = scalar_lea.vmem [#allocation8], 32
    %158 = vst [vmem:[%s157] sm:$0xff] %v155
    %159 = vst [vmem:[%s157 + $0x8] sm:$0xff] %v156
    %v160 = vsel %vm151, 0.0, %v149
    %v161 = vsel %vm152, 0.0, %v150
    %162 = vst [vmem:[#allocation2] sm:$0xff] %v160
    %163 = vst [vmem:[#allocation2 + $0x8] sm:$0xff] %v161
    %v164 = vmul.f32 %v143, 0.7
    %v165 = vmul.f32 %v144, 0.7
    %v166 = vadd.f32 %v164, 0.2
    %v167 = vadd.f32 %v165, 0.2
    %v168 = vsel %vm151, %v166, %v164
    %v169 = vsel %vm152, %v167, %v165
    %170 = vst [vmem:[#allocation3] sm:$0xff] %v168
    %171 = vst [vmem:[#allocation3 + $0x8] sm:$0xff] %v169
    %s172 = scalar_lea.vmem [#allocation5], 48
    %v173 = vld [vmem:[%s172] sm:$0xff]
    %v174 = vld [vmem:[%s172 + $0x8] sm:$0xff]
    %v175 = vld [vmem:[#allocation2] sm:$0xff]
    %v176 = vld [vmem:[#allocation2 + $0x8] sm:$0xff]
    %v177 = vld [vmem:[#allocation3] sm:$0xff]
    %v178 = vld [vmem:[#allocation3 + $0x8] sm:$0xff]
    %v179 = vsub.f32 %v173, %v175
    %v180 = vsub.f32 %v174, %v176
    %v181 = vmul.f32 %v179, %v79
    %v182 = vmul.f32 %v180, %v79
    %v183 = vadd.f32 %v175, %v181
    %v184 = vadd.f32 %v176, %v182
    %vm185 = vcmp.gt.f32.partialorder %v183, %v177
    %vm186 = vcmp.gt.f32.partialorder %v184, %v178
    %v187 = vsel %vm185, 1, 0
    %v188 = vsel %vm186, 1, 0
    %v189 = vcvt.s32.f32 %v187
    %v190 = vcvt.s32.f32 %v188
    %s191 = scalar_lea.vmem [#allocation8], 48
    %192 = vst [vmem:[%s191] sm:$0xff] %v189
    %193 = vst [vmem:[%s191 + $0x8] sm:$0xff] %v190
    %v194 = vsel %vm185, 0.0, %v183
    %v195 = vsel %vm186, 0.0, %v184
    %196 = vst [vmem:[#allocation2] sm:$0xff] %v194
    %197 = vst [vmem:[#allocation2 + $0x8] sm:$0xff] %v195
    %v198 = vmul.f32 %v177, 0.7
    %v199 = vmul.f32 %v178, 0.7
    %v200 = vadd.f32 %v198, 0.2
    %v201 = vadd.f32 %v199, 0.2
    %v202 = vsel %vm185, %v200, %v198
    %v203 = vsel %vm186, %v201, %v199
    %204 = vst [vmem:[#allocation3] sm:$0xff] %v202
    %205 = vst [vmem:[#allocation3 + $0x8] sm:$0xff] %v203
    %s206 = scalar_lea.vmem [#allocation5], 64
    %v207 = vld [vmem:[%s206] sm:$0xff]
    %v208 = vld [vmem:[%s206 + $0x8] sm:$0xff]
    %v209 = vld [vmem:[#allocation2] sm:$0xff]
    %v210 = vld [vmem:[#allocation2 + $0x8] sm:$0xff]
    %v211 = vld [vmem:[#allocation3] sm:$0xff]
    %v212 = vld [vmem:[#allocation3 + $0x8] sm:$0xff]
    %v213 = vsub.f32 %v207, %v209
    %v214 = vsub.f32 %v208, %v210
    %v215 = vmul.f32 %v213, %v79
    %v216 = vmul.f32 %v214, %v79
    %v217 = vadd.f32 %v209, %v215
    %v218 = vadd.f32 %v210, %v216
    %vm219 = vcmp.gt.f32.partialorder %v217, %v211
    %vm220 = vcmp.gt.f32.partialorder %v218, %v212
    %v221 = vsel %vm219, 1, 0
    %v222 = vsel %vm220, 1, 0
    %v223 = vcvt.s32.f32 %v221
    %v224 = vcvt.s32.f32 %v222
    %s225 = scalar_lea.vmem [#allocation8], 64
    %226 = vst [vmem:[%s225] sm:$0xff] %v223
    %227 = vst [vmem:[%s225 + $0x8] sm:$0xff] %v224
    %v228 = vsel %vm219, 0.0, %v217
    %v229 = vsel %vm220, 0.0, %v218
    %230 = vst [vmem:[#allocation2] sm:$0xff] %v228
    %231 = vst [vmem:[#allocation2 + $0x8] sm:$0xff] %v229
    %v232 = vmul.f32 %v211, 0.7
    %v233 = vmul.f32 %v212, 0.7
    %v234 = vadd.f32 %v232, 0.2
    %v235 = vadd.f32 %v233, 0.2
    %v236 = vsel %vm219, %v234, %v232
    %v237 = vsel %vm220, %v235, %v233
    %238 = vst [vmem:[#allocation3] sm:$0xff] %v236
    %239 = vst [vmem:[#allocation3 + $0x8] sm:$0xff] %v237
    %s240 = scalar_lea.vmem [#allocation5], 80
    %v241 = vld [vmem:[%s240] sm:$0xff]
    %v242 = vld [vmem:[%s240 + $0x8] sm:$0xff]
    %v243 = vld [vmem:[#allocation2] sm:$0xff]
    %v244 = vld [vmem:[#allocation2 + $0x8] sm:$0xff]
    %v245 = vld [vmem:[#allocation3] sm:$0xff]
    %v246 = vld [vmem:[#allocation3 + $0x8] sm:$0xff]
    %v247 = vsub.f32 %v241, %v243
    %v248 = vsub.f32 %v242, %v244
    %v249 = vmul.f32 %v247, %v79
    %v250 = vmul.f32 %v248, %v79
    %v251 = vadd.f32 %v243, %v249
    %v252 = vadd.f32 %v244, %v250
    %vm253 = vcmp.gt.f32.partialorder %v251, %v245
    %vm254 = vcmp.gt.f32.partialorder %v252, %v246
    %v255 = vsel %vm253, 1, 0
    %v256 = vsel %vm254, 1, 0
    %v257 = vcvt.s32.f32 %v255
    %v258 = vcvt.s32.f32 %v256
    %s259 = scalar_lea.vmem [#allocation8], 80
    %260 = vst [vmem:[%s259] sm:$0xff] %v257
    %261 = vst [vmem:[%s259 + $0x8] sm:$0xff] %v258
    %v262 = vsel %vm253, 0.0, %v251
    %v263 = vsel %vm254, 0.0, %v252
    %264 = vst [vmem:[#allocation2] sm:$0xff] %v262
    %265 = vst [vmem:[#allocation2 + $0x8] sm:$0xff] %v263
    %v266 = vmul.f32 %v245, 0.7
    %v267 = vmul.f32 %v246, 0.7
    %v268 = vadd.f32 %v266, 0.2
    %v269 = vadd.f32 %v267, 0.2
    %v270 = vsel %vm253, %v268, %v266
    %v271 = vsel %vm254, %v269, %v267
    %272 = vst [vmem:[#allocation3] sm:$0xff] %v270
    %273 = vst [vmem:[#allocation3 + $0x8] sm:$0xff] %v271
    %s274 = scalar_lea.vmem [#allocation5], 96
    %v275 = vld [vmem:[%s274] sm:$0xff]
    %v276 = vld [vmem:[%s274 + $0x8] sm:$0xff]
    %v277 = vld [vmem:[#allocation2] sm:$0xff]
    %v278 = vld [vmem:[#allocation2 + $0x8] sm:$0xff]
    %v279 = vld [vmem:[#allocation3] sm:$0xff]
    %v280 = vld [vmem:[#allocation3 + $0x8] sm:$0xff]
    %v281 = vsub.f32 %v275, %v277
    %v282 = vsub.f32 %v276, %v278
    %v283 = vmul.f32 %v281, %v79
    %v284 = vmul.f32 %v282, %v79
    %v285 = vadd.f32 %v277, %v283
    %v286 = vadd.f32 %v278, %v284
    %vm287 = vcmp.gt.f32.partialorder %v285, %v279
    %vm288 = vcmp.gt.f32.partialorder %v286, %v280
    %v289 = vsel %vm287, 1, 0
    %v290 = vsel %vm288, 1, 0
    %v291 = vcvt.s32.f32 %v289
    %v292 = vcvt.s32.f32 %v290
    %s293 = scalar_lea.vmem [#allocation8], 96
    %294 = vst [vmem:[%s293] sm:$0xff] %v291
    %295 = vst [vmem:[%s293 + $0x8] sm:$0xff] %v292
    %v296 = vsel %vm287, 0.0, %v285
    %v297 = vsel %vm288, 0.0, %v286
    %298 = vst [vmem:[#allocation2] sm:$0xff] %v296
    %299 = vst [vmem:[#allocation2 + $0x8] sm:$0xff] %v297
    %v300 = vmul.f32 %v279, 0.7
    %v301 = vmul.f32 %v280, 0.7
    %v302 = vadd.f32 %v300, 0.2
    %v303 = vadd.f32 %v301, 0.2
    %v304 = vsel %vm287, %v302, %v300
    %v305 = vsel %vm288, %v303, %v301
    %306 = vst [vmem:[#allocation3] sm:$0xff] %v304
    %307 = vst [vmem:[#allocation3 + $0x8] sm:$0xff] %v305
    %s308 = scalar_lea.vmem [#allocation5], 112
    %v309 = vld [vmem:[%s308] sm:$0xff]
    %v310 = vld [vmem:[%s308 + $0x8] sm:$0xff]
    %v311 = vld [vmem:[#allocation2] sm:$0xff]
    %v312 = vld [vmem:[#allocation2 + $0x8] sm:$0xff]
    %v313 = vld [vmem:[#allocation3] sm:$0xff]
    %v314 = vld [vmem:[#allocation3 + $0x8] sm:$0xff]
    %v315 = vsub.f32 %v309, %v311
    %v316 = vsub.f32 %v310, %v312
    %v317 = vmul.f32 %v315, %v79
    %v318 = vmul.f32 %v316, %v79
    %v319 = vadd.f32 %v311, %v317
    %v320 = vadd.f32 %v312, %v318
    %vm321 = vcmp.gt.f32.partialorder %v319, %v313
    %vm322 = vcmp.gt.f32.partialorder %v320, %v314
    %v323 = vsel %vm321, 1, 0
    %v324 = vsel %vm322, 1, 0
    %v325 = vcvt.s32.f32 %v323
    %v326 = vcvt.s32.f32 %v324
    %s327 = scalar_lea.vmem [#allocation8], 112
    %328 = vst [vmem:[%s327] sm:$0xff] %v325
    %329 = vst [vmem:[%s327 + $0x8] sm:$0xff] %v326
    %v330 = vsel %vm321, 0.0, %v319
    %v331 = vsel %vm322, 0.0, %v320
    %332 = vst [vmem:[#allocation2] sm:$0xff] %v330
    %333 = vst [vmem:[#allocation2 + $0x8] sm:$0xff] %v331
    %v334 = vmul.f32 %v313, 0.7
    %v335 = vmul.f32 %v314, 0.7
    %v336 = vadd.f32 %v334, 0.2
    %v337 = vadd.f32 %v335, 0.2
    %v338 = vsel %vm321, %v336, %v334
    %v339 = vsel %vm322, %v337, %v335
    %340 = vst [vmem:[#allocation3] sm:$0xff] %v338
    %341 = vst [vmem:[#allocation3 + $0x8] sm:$0xff] %v339
    // Predicated region
    $region28: #{plif_steps.1} parent=1 // pred_check
      %p342 = pneg %p33
    $region29: #{plif_steps.1} parent=1 // pred_check_branch
      %344 = sbr.rel (%p342) target = $region31
    $region30: #{plif_steps.1} parent=1 // pred_region
      $region32: #{plif_steps.1} parent=30
        #allocation17 [shape = 's32[1]{0}', space=sflag, size = 0x4, scoped, tag = 'scoped memory for plif_steps.1']
        %s345 = smul.addr %s32, 16
        %s346 = scalar_lea.hbm %s5, %s345
        // Predicated region
        $region33: #{plif_steps.1} parent=32 // pred_check
          _
        $region34: #{plif_steps.1} parent=32 // pred_check_branch
          %348 = sbr.rel target = $region36
        $region35: #{plif_steps.1} parent=32 // pred_region
          %349 = sst [smem:[#allocation12]] [#allocation19]
          %350 = sst [smem:[#allocation13]] [#allocation18]
        $region36: #{plif_steps.1} parent=32 // pred_fallthru
          _
        %352 = shalt.err (0)
        %s354 = sshll.u32 [#allocation2], 4
        %s355 = int_to_ptr.vmem [resolvable:$true] %s354
        %357 = dma.vmem_to_hbm [thread:$0]  %s355, 256, %s346, [#allocation17]
        %s358 = smul.u32 16, 1
        %s359 = sshll.u32 %s358, 4
        %360 = dma.done [#allocation17], %s359
      $region37: #{plif_steps.1} parent=30
        #allocation20 [shape = 's32[1]{0}', space=sflag, size = 0x4, scoped, tag = 'scoped memory for plif_steps.1']
        %s361 = smul.addr %s32, 16
        %s362 = scalar_lea.hbm %s6, %s361
        // Predicated region
        $region38: #{plif_steps.1} parent=37 // pred_check
          _
        $region39: #{plif_steps.1} parent=37 // pred_check_branch
          %364 = sbr.rel target = $region41
        $region40: #{plif_steps.1} parent=37 // pred_region
          %365 = sst [smem:[#allocation12]] [#allocation22]
          %366 = sst [smem:[#allocation13]] [#allocation21]
        $region41: #{plif_steps.1} parent=37 // pred_fallthru
          _
        %368 = shalt.err (0)
        %s370 = sshll.u32 [#allocation3], 4
        %s371 = int_to_ptr.vmem [resolvable:$true] %s370
        %373 = dma.vmem_to_hbm [thread:$0]  %s371, 256, %s362, [#allocation20]
        %s374 = smul.u32 16, 1
        %s375 = sshll.u32 %s374, 4
        %376 = dma.done [#allocation20], %s375
    $region31: #{plif_steps.1} parent=1 // pred_fallthru
      _
    // Predicated region
    $region42: #{plif_steps.1} parent=1 // pred_check
      _
    $region43: #{plif_steps.1} parent=1 // pred_check_branch
      %378 = sbr.rel (0) target = $region45
    $region44: #{plif_steps.1} parent=1 // pred_region
      %s380 = ssub.s32 2048, 2048
      %381 = vsyncadd [#allocation7], %s380
      %s382 = sshll.u32 [#allocation8], 4
      %s383 = int_to_ptr.vmem [resolvable:$true] %s382
      %388 = dma.vmem_to_hbm [thread:$0]  %s383, 2048, %s4, [#allocation7], 128, 128, 8
    $region45: #{plif_steps.1} parent=1 // pred_fallthru
      _
    // Predicated region
    $region46: #{plif_steps.1} parent=1 // pred_check
      _
    $region47: #{plif_steps.1} parent=1 // pred_check_branch
      %390 = sbr.rel (0) target = $region49
    $region48: #{plif_steps.1} parent=1 // pred_region
      %391 = dma.done [#allocation7], 2048
    $region49: #{plif_steps.1} parent=1 // pred_fallthru
      _
    %392 = vsyncpa [#allocation6], 1
    %393 = vsyncpa [#allocation7], 1

</llo_original>
